<compile_context>
chip_gen: v7x
topology: tpu7x:2x2x1
jax: 0.10.0
libtpu: 0.0.40
codegen_flags: <defaults>
</compile_context>

<pallas_src>
import functools

import jax
import jax.numpy as jnp
from jax.experimental import pallas as pl
from jax.experimental.pallas import tpu as pltpu

STATE_DIM = 3      # Pendulum-v0 observation dim
ACTION_DIM = 1     # Pendulum-v0 action dim
HIDDEN_DIM = 64


def _round_up(n, m):
    return ((n + m - 1) // m) * m


def s_net_kernel(xaT_ref, w1_ref, b1_ref, w2_ref, b2_ref, w3_ref, b3_ref,
                 out_ref):
    """One batch tile of the 3-layer MLP, batch on the lane axis.

    xaT_ref : (in_dim, TB)  f32      w1_ref : (hidden, in_dim)  f32
    b1_ref  : (hidden, 1)   f32
    w2_ref  : (hidden, hidden) bf16  b2_ref : (hidden, 1) f32
    w3_ref  : (state_dim, hidden) bf16  b3_ref : (state_dim, 1) f32
    out_ref : (state_dim, TB) f32
    """
    xaT = xaT_ref[...]                       # (in_dim, TB)
    w1 = w1_ref[...]                         # (hidden, in_dim)
    in_dim = w1_ref.shape[1]

    # fc1: K = in_dim = 4 is far too small for the MXU -> unrolled rank-1
    # broadcast MACs on the VPU (f32, v5e-safe).
    h1 = w1[:, 0:1] * xaT[0:1, :]            # (hidden,1)*(1,TB) -> (hidden,TB)
    for k in range(1, in_dim):
        h1 = h1 + w1[:, k:k + 1] * xaT[k:k + 1, :]
    h1 = jnp.maximum(h1 + b1_ref[...], 0.0)  # relu(fc1), f32

    # fc2: single-pass bf16 MXU matmul, f32 accumulation.
    h2 = jnp.dot(w2_ref[...], h1.astype(jnp.bfloat16),
                 preferred_element_type=jnp.float32)
    h2 = jnp.maximum(h2 + b2_ref[...], 0.0)  # relu(fc2), f32

    # fc_out: bf16 MXU, f32 accumulation.
    out = jnp.dot(w3_ref[...], h2.astype(jnp.bfloat16),
                  preferred_element_type=jnp.float32)
    out_ref[...] = out + b3_ref[...]


def init_params(key, state_dim=STATE_DIM, hidden_dim=HIDDEN_DIM,
                action_dim=ACTION_DIM):
    """nn.Linear-style init: U(-1/sqrt(fan_in), 1/sqrt(fan_in)).

    Weights are stored in the PyTorch layout (out_features, in_features).
    """
    in_dim = state_dim + action_dim
    ks = jax.random.split(key, 6)

    def uni(k, shape, fan_in):
        bound = 1.0 / jnp.sqrt(jnp.float32(fan_in))
        return jax.random.uniform(k, shape, jnp.float32, -bound, bound)

    w1 = uni(ks[0], (hidden_dim, in_dim), in_dim)
    b1 = uni(ks[1], (hidden_dim,), in_dim)
    w2 = uni(ks[2], (hidden_dim, hidden_dim), hidden_dim)
    b2 = uni(ks[3], (hidden_dim,), hidden_dim)
    w3 = uni(ks[4], (state_dim, hidden_dim), hidden_dim)
    b3 = uni(ks[5], (state_dim,), hidden_dim)
    return w1, b1, w2, b2, w3, b3


@functools.partial(jax.jit, static_argnames=("tb_max",))
def s_net_forward(x, a, params, *, tb_max=1024):
    """x: (B, state_dim), a: (B, action_dim) -> (B, state_dim)."""
    w1, b1, w2, b2, w3, b3 = params
    B, state_dim = x.shape
    action_dim = a.shape[1]
    hidden_dim = w1.shape[0]
    in_dim = state_dim + action_dim

    # One fused concat + transpose + pad: a single (in_dim, b_pad) SoA input.
    # Padding is only up to the next multiple of 128 lanes (waste < 128 cols).
    b_pad = _round_up(B, 128)
    xa = jnp.concatenate([x.astype(jnp.float32), a.astype(jnp.float32)],
                         axis=1)
    xaT = jnp.pad(xa.T, ((0, 0), (0, b_pad - B)))

    # Pre-cast the MXU weights to bf16 once (f32 accumulation in-kernel);
    # fc1 weights / all biases stay f32 for the VPU path (v5e-safe).
    w1f = w1.astype(jnp.float32)
    w2b = w2.astype(jnp.bfloat16)
    w3b = w3.astype(jnp.bfloat16)
    b1c = b1.reshape(hidden_dim, 1).astype(jnp.float32)
    b2c = b2.reshape(hidden_dim, 1).astype(jnp.float32)
    b3c = b3.reshape(state_dim, 1).astype(jnp.float32)

    # Batch tile: multiple of 128 lanes; at least 2 tiles when B > 128 so the
    # "parallel" grid axis can be sharded across v7x's two TensorCores.  The
    # last tile may be partial (Pallas masks the out-of-bounds columns).
    tb_cap = max(128, _round_up(tb_max, 128))
    if b_pad <= 128:
        tb = 128
    else:
        tb = min(tb_cap, _round_up(pl.cdiv(b_pad, 2), 128))
    grid = (pl.cdiv(b_pad, tb),)

    const = lambda i: (0, 0)   # weights/biases stay VMEM-resident (no re-DMA)
    outT = pl.pallas_call(
        s_net_kernel,
        out_shape=jax.ShapeDtypeStruct((state_dim, b_pad), jnp.float32),
        grid=grid,
        in_specs=[
            pl.BlockSpec((in_dim, tb), lambda i: (0, i)),       # xaT
            pl.BlockSpec((hidden_dim, in_dim), const),          # w1
            pl.BlockSpec((hidden_dim, 1), const),               # b1
            pl.BlockSpec((hidden_dim, hidden_dim), const),      # w2 (bf16)
            pl.BlockSpec((hidden_dim, 1), const),               # b2
            pl.BlockSpec((state_dim, hidden_dim), const),       # w3 (bf16)
            pl.BlockSpec((state_dim, 1), const),                # b3
        ],
        out_specs=pl.BlockSpec((state_dim, tb), lambda i: (0, i)),
        compiler_params=pltpu.CompilerParams(
            dimension_semantics=("parallel",)),
    )(xaT, w1f, b1c, w2b, b2c, w3b, b3c)

    # NOTE: for the actual MPC rollout the caller can keep state/action in
    # (feature, B) SoA layout and skip this transpose pair entirely.
    return outT[:, :B].T


def s_net_reference(x, a, params):
    """Pure-JAX reference matching the PyTorch module (f32)."""
    w1, b1, w2, b2, w3, b3 = params
    cat = jnp.concatenate([x, a], axis=1)
    h1 = jnp.maximum(cat @ w1.T + b1, 0.0)
    h2 = jnp.maximum(h1 @ w2.T + b2, 0.0)
    return h2 @ w3.T + b3


if __name__ == "__main__":
    key = jax.random.PRNGKey(0)
    kx, ka, kp = jax.random.split(key, 3)
    params = init_params(kp)

    # Small, Pendulum-shaped batch (single tile).
    B = 8
    x = jax.random.normal(kx, (B, STATE_DIM), jnp.float32)
    a = jax.random.normal(ka, (B, ACTION_DIM), jnp.float32)
    out = jax.block_until_ready(s_net_forward(x, a, params))
    ref = s_net_reference(x, a, params)
    assert out.shape == (B, STATE_DIM)
    # bf16 MXU operands -> loosen tolerance vs the f32 reference.
    assert jnp.allclose(out, ref, atol=2e-2, rtol=2e-2), "mismatch (B=8)"

    # Second shape exercises multiple grid steps + a partial (masked) last
    # tile: B=300 -> b_pad=384, tb=256 -> grid=(2,), last tile half-valid.
    B2 = 300
    x2 = jax.random.normal(kx, (B2, STATE_DIM), jnp.float32)
    a2 = jax.random.normal(ka, (B2, ACTION_DIM), jnp.float32)
    out2 = jax.block_until_ready(s_net_forward(x2, a2, params, tb_max=256))
    ref2 = s_net_reference(x2, a2, params)
    assert out2.shape == (B2, STATE_DIM)
    assert jnp.allclose(out2, ref2, atol=2e-2, rtol=2e-2), "mismatch (B=300)"

    print("KERNEL_OK")
</pallas_src>

<mosaic_0001>
module attributes {stable_mosaic.version = 11 : i64} {
  func.func @s_net_kernel(%arg0: i32, %arg1: memref<4x128xf32, #tpu.memory_space<vmem>>, %arg2: memref<64x4xf32, #tpu.memory_space<vmem>>, %arg3: memref<64x1xf32, #tpu.memory_space<vmem>>, %arg4: memref<64x64xbf16, #tpu.memory_space<vmem>>, %arg5: memref<64x1xf32, #tpu.memory_space<vmem>>, %arg6: memref<3x64xbf16, #tpu.memory_space<vmem>>, %arg7: memref<3x1xf32, #tpu.memory_space<vmem>>, %arg8: memref<3x128xf32, #tpu.memory_space<vmem>>) attributes {dimension_semantics = [#tpu.dimension_semantics<parallel>], iteration_bounds = array<i64: 1>, scalar_prefetch = 0 : i64, scratch_operands = 0 : i64, tpu.core_type = #tpu.core_type<tc>, window_params = [{transform_indices = @transform_0, window_bounds = array<i64: 4, 128>}, {pipeline_mode = #tpu.pipeline_mode<synchronous>, transform_indices = @transform_1, window_bounds = array<i64: 64, 4>}, {pipeline_mode = #tpu.pipeline_mode<synchronous>, transform_indices = @transform_2, window_bounds = array<i64: 64, 1>}, {pipeline_mode = #tpu.pipeline_mode<synchronous>, transform_indices = @transform_3, window_bounds = array<i64: 64, 64>}, {pipeline_mode = #tpu.pipeline_mode<synchronous>, transform_indices = @transform_4, window_bounds = array<i64: 64, 1>}, {pipeline_mode = #tpu.pipeline_mode<synchronous>, transform_indices = @transform_5, window_bounds = array<i64: 3, 64>}, {pipeline_mode = #tpu.pipeline_mode<synchronous>, transform_indices = @transform_6, window_bounds = array<i64: 3, 1>}, {transform_indices = @transform_7, window_bounds = array<i64: 3, 128>}]} {
    %c0 = arith.constant 0 : index
    %c0_0 = arith.constant 0 : index
    %0 = vector.load %arg1[%c0, %c0_0] : memref<4x128xf32, #tpu.memory_space<vmem>>, vector<4x128xf32>
    %c0_1 = arith.constant 0 : index
    %c0_2 = arith.constant 0 : index
    %1 = vector.load %arg2[%c0_1, %c0_2] : memref<64x4xf32, #tpu.memory_space<vmem>>, vector<64x4xf32>
    %2 = vector.extract_strided_slice %1 {offsets = [0, 0], sizes = [64, 1], strides = [1, 1]} : vector<64x4xf32> to vector<64x1xf32>
    %3 = vector.extract_strided_slice %0 {offsets = [0, 0], sizes = [1, 128], strides = [1, 1]} : vector<4x128xf32> to vector<1x128xf32>
    %4 = vector.broadcast %2 : vector<64x1xf32> to vector<64x128xf32>
    %5 = vector.broadcast %3 : vector<1x128xf32> to vector<64x128xf32>
    %6 = arith.mulf %4, %5 : vector<64x128xf32>
    %7 = vector.extract_strided_slice %1 {offsets = [0, 1], sizes = [64, 1], strides = [1, 1]} : vector<64x4xf32> to vector<64x1xf32>
    %8 = vector.extract_strided_slice %0 {offsets = [1, 0], sizes = [1, 128], strides = [1, 1]} : vector<4x128xf32> to vector<1x128xf32>
    %9 = vector.broadcast %7 : vector<64x1xf32> to vector<64x128xf32>
    %10 = vector.broadcast %8 : vector<1x128xf32> to vector<64x128xf32>
    %11 = arith.mulf %9, %10 : vector<64x128xf32>
    %12 = arith.addf %6, %11 : vector<64x128xf32>
    %13 = vector.extract_strided_slice %1 {offsets = [0, 2], sizes = [64, 1], strides = [1, 1]} : vector<64x4xf32> to vector<64x1xf32>
    %14 = vector.extract_strided_slice %0 {offsets = [2, 0], sizes = [1, 128], strides = [1, 1]} : vector<4x128xf32> to vector<1x128xf32>
    %15 = vector.broadcast %13 : vector<64x1xf32> to vector<64x128xf32>
    %16 = vector.broadcast %14 : vector<1x128xf32> to vector<64x128xf32>
    %17 = arith.mulf %15, %16 : vector<64x128xf32>
    %18 = arith.addf %12, %17 : vector<64x128xf32>
    %19 = vector.extract_strided_slice %1 {offsets = [0, 3], sizes = [64, 1], strides = [1, 1]} : vector<64x4xf32> to vector<64x1xf32>
    %20 = vector.extract_strided_slice %0 {offsets = [3, 0], sizes = [1, 128], strides = [1, 1]} : vector<4x128xf32> to vector<1x128xf32>
    %21 = vector.broadcast %19 : vector<64x1xf32> to vector<64x128xf32>
    %22 = vector.broadcast %20 : vector<1x128xf32> to vector<64x128xf32>
    %23 = arith.mulf %21, %22 : vector<64x128xf32>
    %24 = arith.addf %18, %23 : vector<64x128xf32>
    %c0_3 = arith.constant 0 : index
    %c0_4 = arith.constant 0 : index
    %25 = vector.load %arg3[%c0_3, %c0_4] : memref<64x1xf32, #tpu.memory_space<vmem>>, vector<64x1xf32>
    %26 = vector.broadcast %25 : vector<64x1xf32> to vector<64x128xf32>
    %27 = arith.addf %24, %26 : vector<64x128xf32>
    %cst = arith.constant 0.000000e+00 : f32
    %28 = vector.broadcast %cst : f32 to vector<64x128xf32>
    %29 = arith.maximumf %27, %28 : vector<64x128xf32>
    %c0_5 = arith.constant 0 : index
    %c0_6 = arith.constant 0 : index
    %30 = vector.load %arg4[%c0_5, %c0_6] : memref<64x64xbf16, #tpu.memory_space<vmem>>, vector<64x64xbf16>
    %31 = arith.truncf %29 : vector<64x128xf32> to vector<64x128xbf16>
    %cst_7 = arith.constant dense<0.000000e+00> : vector<64x128xf32>
    %32 = tpu.matmul %30, %31, %cst_7 {dimension_numbers = #tpu.dot_dimension_numbers<[1], [0], [0], [1], [0, 0, 1, 1], [], []>} : vector<64x64xbf16>, vector<64x128xbf16>, vector<64x128xf32> -> vector<64x128xf32>
    %c0_8 = arith.constant 0 : index
    %c0_9 = arith.constant 0 : index
    %33 = vector.load %arg5[%c0_8, %c0_9] : memref<64x1xf32, #tpu.memory_space<vmem>>, vector<64x1xf32>
    %34 = vector.broadcast %33 : vector<64x1xf32> to vector<64x128xf32>
    %35 = arith.addf %32, %34 : vector<64x128xf32>
    %cst_10 = arith.constant 0.000000e+00 : f32
    %36 = vector.broadcast %cst_10 : f32 to vector<64x128xf32>
    %37 = arith.maximumf %35, %36 : vector<64x128xf32>
    %c0_11 = arith.constant 0 : index
    %c0_12 = arith.constant 0 : index
    %38 = vector.load %arg6[%c0_11, %c0_12] : memref<3x64xbf16, #tpu.memory_space<vmem>>, vector<3x64xbf16>
    %39 = arith.truncf %37 : vector<64x128xf32> to vector<64x128xbf16>
    %cst_13 = arith.constant dense<0.000000e+00> : vector<3x128xf32>
    %40 = tpu.matmul %38, %39, %cst_13 {dimension_numbers = #tpu.dot_dimension_numbers<[1], [0], [0], [1], [0, 0, 1, 1], [], []>} : vector<3x64xbf16>, vector<64x128xbf16>, vector<3x128xf32> -> vector<3x128xf32>
    %c0_14 = arith.constant 0 : index
    %c0_15 = arith.constant 0 : index
    %41 = vector.load %arg7[%c0_14, %c0_15] : memref<3x1xf32, #tpu.memory_space<vmem>>, vector<3x1xf32>
    %42 = vector.broadcast %41 : vector<3x1xf32> to vector<3x128xf32>
    %43 = arith.addf %40, %42 : vector<3x128xf32>
    %c0_16 = arith.constant 0 : index
    %c0_17 = arith.constant 0 : index
    %44 = vector.load %arg8[%c0_16, %c0_17] : memref<3x128xf32, #tpu.memory_space<vmem>>, vector<3x128xf32>
    tpu.vector_store %arg8[%c0_16, %c0_17], %43 {strides = array<i32>} : memref<3x128xf32, #tpu.memory_space<vmem>>, vector<3x128xf32>,
    return
  }
  func.func @transform_0(%arg0: i32) -> (i32, i32) {
    %c0_i32 = arith.constant 0 : i32
    %c0_i32_0 = arith.constant 0 : i32
    return %c0_i32, %arg0 : i32, i32
  }
  func.func @transform_1(%arg0: i32) -> (i32, i32) {
    %c0_i32 = arith.constant 0 : i32
    %c0_i32_0 = arith.constant 0 : i32
    %c0_i32_1 = arith.constant 0 : i32
    return %c0_i32, %c0_i32_0 : i32, i32
  }
  func.func @transform_2(%arg0: i32) -> (i32, i32) {
    %c0_i32 = arith.constant 0 : i32
    %c0_i32_0 = arith.constant 0 : i32
    %c0_i32_1 = arith.constant 0 : i32
    return %c0_i32, %c0_i32_0 : i32, i32
  }
  func.func @transform_3(%arg0: i32) -> (i32, i32) {
    %c0_i32 = arith.constant 0 : i32
    %c0_i32_0 = arith.constant 0 : i32
    %c0_i32_1 = arith.constant 0 : i32
    return %c0_i32, %c0_i32_0 : i32, i32
  }
  func.func @transform_4(%arg0: i32) -> (i32, i32) {
    %c0_i32 = arith.constant 0 : i32
    %c0_i32_0 = arith.constant 0 : i32
    %c0_i32_1 = arith.constant 0 : i32
    return %c0_i32, %c0_i32_0 : i32, i32
  }
  func.func @transform_5(%arg0: i32) -> (i32, i32) {
    %c0_i32 = arith.constant 0 : i32
    %c0_i32_0 = arith.constant 0 : i32
    %c0_i32_1 = arith.constant 0 : i32
    return %c0_i32, %c0_i32_0 : i32, i32
  }
  func.func @transform_6(%arg0: i32) -> (i32, i32) {
    %c0_i32 = arith.constant 0 : i32
    %c0_i32_0 = arith.constant 0 : i32
    %c0_i32_1 = arith.constant 0 : i32
    return %c0_i32, %c0_i32_0 : i32, i32
  }
  func.func @transform_7(%arg0: i32) -> (i32, i32) {
    %c0_i32 = arith.constant 0 : i32
    %c0_i32_0 = arith.constant 0 : i32
    return %c0_i32, %arg0 : i32, i32
  }
}

</mosaic_0001>

<llo_original>
// kernel: s_net_forward.1
$region0: #{s_net_forward.1}
  #allocation0 [shape = 'u32[]', space=smem, size = 0x4, offset = 0x4, fixed_abs, tag = 'smem constant byte address 0x4 - core index']
  #allocation1 [shape = 'u32[144,128]{1,0:T(1,128)}', space=vmem, size = 0x12000, scoped, tag = 'internal scratch']
  %s0 = inlined_call_operand.vmem [shape: f32[4,128], index: 0, kind: input, shape index: {}]
  %s1 = inlined_call_operand.vmem [shape: f32[64,4], index: 1, kind: input, shape index: {}]
  %s2 = inlined_call_operand.vmem [shape: f32[64,1], index: 2, kind: input, shape index: {}]
  %s3 = inlined_call_operand.vmem [shape: bf16[64,64], index: 3, kind: input, shape index: {}]
  %s4 = inlined_call_operand.vmem [shape: f32[64,1], index: 4, kind: input, shape index: {}]
  %s5 = inlined_call_operand.vmem [shape: bf16[3,64], index: 5, kind: input, shape index: {}]
  %s6 = inlined_call_operand.vmem [shape: f32[3,1], index: 6, kind: input, shape index: {}]
  %s7 = inlined_call_operand.vmem [shape: f32[3,128], index: 7, kind: output, shape index: {}]
  %s8 = sld [smem:[#allocation0]]
  $region38: #{s_net_forward.1} parent=0
    _
  %s10 = ssub.s32 1, %s8
  %s11 = scalar_select 0, %s10, %s8
  // Predicated region
  $region2: #{s_net_forward.1} parent=0 // pred_check
    _
  $region3: #{s_net_forward.1} parent=0 // pred_check_branch
    %13 = sbr.rel (0) target = $region5
  $region4: #{s_net_forward.1} parent=0 // pred_region
    _
  $region5: #{s_net_forward.1} parent=0 // pred_fallthru
    _
  // Predicated region
  $region6: #{s_net_forward.1} parent=0 // pred_check
    _
  $region7: #{s_net_forward.1} parent=0 // pred_check_branch
    %15 = sbr.rel (0) target = $region9
  $region8: #{s_net_forward.1} parent=0 // pred_region
    _
  $region9: #{s_net_forward.1} parent=0 // pred_fallthru
    _
  // Predicated region
  $region10: #{s_net_forward.1} parent=0 // pred_check
    _
  $region11: #{s_net_forward.1} parent=0 // pred_check_branch
    %17 = sbr.rel (0) target = $region13
  $region12: #{s_net_forward.1} parent=0 // pred_region
    _
  $region13: #{s_net_forward.1} parent=0 // pred_fallthru
    _
  // Predicated region
  $region14: #{s_net_forward.1} parent=0 // pred_check
    _
  $region15: #{s_net_forward.1} parent=0 // pred_check_branch
    %19 = sbr.rel (0) target = $region17
  $region16: #{s_net_forward.1} parent=0 // pred_region
    _
  $region17: #{s_net_forward.1} parent=0 // pred_fallthru
    _
  // Predicated region
  $region18: #{s_net_forward.1} parent=0 // pred_check
    _
  $region19: #{s_net_forward.1} parent=0 // pred_check_branch
    %21 = sbr.rel (0) target = $region21
  $region20: #{s_net_forward.1} parent=0 // pred_region
    _
  $region21: #{s_net_forward.1} parent=0 // pred_fallthru
    _
  // Predicated region
  $region22: #{s_net_forward.1} parent=0 // pred_check
    _
  $region23: #{s_net_forward.1} parent=0 // pred_check_branch
    %23 = sbr.rel (0) target = $region25
  $region24: #{s_net_forward.1} parent=0 // pred_region
    _
  $region25: #{s_net_forward.1} parent=0 // pred_fallthru
    _
  // Predicated region
  $region26: #{s_net_forward.1} parent=0 // pred_check
    _
  $region27: #{s_net_forward.1} parent=0 // pred_check_branch
    %25 = sbr.rel (0) target = $region29
  $region28: #{s_net_forward.1} parent=0 // pred_region
    _
  $region29: #{s_net_forward.1} parent=0 // pred_fallthru
    _
  %v27 = vld [vmem:[%s0] sm:$0xf]
  %v28 = vld [vmem:[%s1] sm:$0xff]
  %v29 = vld [vmem:[%s1 + $0x8] sm:$0xff]
  %v30 = vld [vmem:[%s1 + $0x10] sm:$0xff]
  %v31 = vld [vmem:[%s1 + $0x18] sm:$0xff]
  %v32 = vld [vmem:[%s1 + $0x20] sm:$0xff]
  %v33 = vld [vmem:[%s1 + $0x28] sm:$0xff]
  %v34 = vld [vmem:[%s1 + $0x30] sm:$0xff]
  %v35 = vld [vmem:[%s1 + $0x38] sm:$0xff]
  %37 = vset.pattern.permute.xlu0 0
  %38 = vperm.xlu0 %37, %v28
  %v39 = vpop.permute.xlu0 %38
  %42 = vset.pattern.permute.xlu0 0
  %43 = vperm.xlu0 %42, %v29
  %v44 = vpop.permute.xlu0 %43
  %47 = vset.pattern.permute.xlu0 0
  %48 = vperm.xlu0 %47, %v30
  %v49 = vpop.permute.xlu0 %48
  %52 = vset.pattern.permute.xlu0 0
  %53 = vperm.xlu0 %52, %v31
  %v54 = vpop.permute.xlu0 %53
  %57 = vset.pattern.permute.xlu0 0
  %58 = vperm.xlu0 %57, %v32
  %v59 = vpop.permute.xlu0 %58
  %62 = vset.pattern.permute.xlu0 0
  %63 = vperm.xlu0 %62, %v33
  %v64 = vpop.permute.xlu0 %63
  %67 = vset.pattern.permute.xlu0 0
  %68 = vperm.xlu0 %67, %v34
  %v69 = vpop.permute.xlu0 %68
  %72 = vset.pattern.permute.xlu0 0
  %73 = vperm.xlu0 %72, %v35
  %v74 = vpop.permute.xlu0 %73
  %v76 = vlaneseq
  %v77 = vshrl.u32 %v76, 7
  %v78 = vsub.s32 0, %v77
  %v79 = vrot.slane %v27, %v78
  %v80 = vmul.f32 %v39, %v79
  %v81 = vmul.f32 %v44, %v79
  %v82 = vmul.f32 %v49, %v79
  %v83 = vmul.f32 %v54, %v79
  %v84 = vmul.f32 %v59, %v79
  %v85 = vmul.f32 %v64, %v79
  %v86 = vmul.f32 %v69, %v79
  %v87 = vmul.f32 %v74, %v79
  %88 = vset.pattern.permute.xlu0 1
  %89 = vperm.xlu0 %88, %v28
  %v90 = vpop.permute.xlu0 %89
  %92 = vset.pattern.permute.xlu0 1
  %93 = vperm.xlu0 %92, %v29
  %v94 = vpop.permute.xlu0 %93
  %96 = vset.pattern.permute.xlu0 1
  %97 = vperm.xlu0 %96, %v30
  %v98 = vpop.permute.xlu0 %97
  %100 = vset.pattern.permute.xlu0 1
  %101 = vperm.xlu0 %100, %v31
  %v102 = vpop.permute.xlu0 %101
  %104 = vset.pattern.permute.xlu0 1
  %105 = vperm.xlu0 %104, %v32
  %v106 = vpop.permute.xlu0 %105
  %108 = vset.pattern.permute.xlu0 1
  %109 = vperm.xlu0 %108, %v33
  %v110 = vpop.permute.xlu0 %109
  %112 = vset.pattern.permute.xlu0 1
  %113 = vperm.xlu0 %112, %v34
  %v114 = vpop.permute.xlu0 %113
  %116 = vset.pattern.permute.xlu0 1
  %117 = vperm.xlu0 %116, %v35
  %v118 = vpop.permute.xlu0 %117
  %v120 = vlaneseq
  %v121 = vshrl.u32 %v120, 7
  %v122 = vsub.s32 1, %v121
  %v123 = vrot.slane %v27, %v122
  %v124 = vmul.f32 %v90, %v123
  %v125 = vmul.f32 %v94, %v123
  %v126 = vmul.f32 %v98, %v123
  %v127 = vmul.f32 %v102, %v123
  %v128 = vmul.f32 %v106, %v123
  %v129 = vmul.f32 %v110, %v123
  %v130 = vmul.f32 %v114, %v123
  %v131 = vmul.f32 %v118, %v123
  %v132 = vadd.f32 %v80, %v124
  %v133 = vadd.f32 %v81, %v125
  %v134 = vadd.f32 %v82, %v126
  %v135 = vadd.f32 %v83, %v127
  %v136 = vadd.f32 %v84, %v128
  %v137 = vadd.f32 %v85, %v129
  %v138 = vadd.f32 %v86, %v130
  %v139 = vadd.f32 %v87, %v131
  %140 = vset.pattern.permute.xlu0 2
  %141 = vperm.xlu0 %140, %v28
  %v142 = vpop.permute.xlu0 %141
  %144 = vset.pattern.permute.xlu0 2
  %145 = vperm.xlu0 %144, %v29
  %v146 = vpop.permute.xlu0 %145
  %148 = vset.pattern.permute.xlu0 2
  %149 = vperm.xlu0 %148, %v30
  %v150 = vpop.permute.xlu0 %149
  %152 = vset.pattern.permute.xlu0 2
  %153 = vperm.xlu0 %152, %v31
  %v154 = vpop.permute.xlu0 %153
  %156 = vset.pattern.permute.xlu0 2
  %157 = vperm.xlu0 %156, %v32
  %v158 = vpop.permute.xlu0 %157
  %160 = vset.pattern.permute.xlu0 2
  %161 = vperm.xlu0 %160, %v33
  %v162 = vpop.permute.xlu0 %161
  %164 = vset.pattern.permute.xlu0 2
  %165 = vperm.xlu0 %164, %v34
  %v166 = vpop.permute.xlu0 %165
  %168 = vset.pattern.permute.xlu0 2
  %169 = vperm.xlu0 %168, %v35
  %v170 = vpop.permute.xlu0 %169
  %v172 = vlaneseq
  %v173 = vshrl.u32 %v172, 7
  %v174 = vsub.s32 2, %v173
  %v175 = vrot.slane %v27, %v174
  %v176 = vmul.f32 %v142, %v175
  %v177 = vmul.f32 %v146, %v175
  %v178 = vmul.f32 %v150, %v175
  %v179 = vmul.f32 %v154, %v175
  %v180 = vmul.f32 %v158, %v175
  %v181 = vmul.f32 %v162, %v175
  %v182 = vmul.f32 %v166, %v175
  %v183 = vmul.f32 %v170, %v175
  %v184 = vadd.f32 %v132, %v176
  %v185 = vadd.f32 %v133, %v177
  %v186 = vadd.f32 %v134, %v178
  %v187 = vadd.f32 %v135, %v179
  %v188 = vadd.f32 %v136, %v180
  %v189 = vadd.f32 %v137, %v181
  %v190 = vadd.f32 %v138, %v182
  %v191 = vadd.f32 %v139, %v183
  %192 = vset.pattern.permute.xlu0 3
  %193 = vperm.xlu0 %192, %v28
  %v194 = vpop.permute.xlu0 %193
  %196 = vset.pattern.permute.xlu0 3
  %197 = vperm.xlu0 %196, %v29
  %v198 = vpop.permute.xlu0 %197
  %200 = vset.pattern.permute.xlu0 3
  %201 = vperm.xlu0 %200, %v30
  %v202 = vpop.permute.xlu0 %201
  %204 = vset.pattern.permute.xlu0 3
  %205 = vperm.xlu0 %204, %v31
  %v206 = vpop.permute.xlu0 %205
  %208 = vset.pattern.permute.xlu0 3
  %209 = vperm.xlu0 %208, %v32
  %v210 = vpop.permute.xlu0 %209
  %212 = vset.pattern.permute.xlu0 3
  %213 = vperm.xlu0 %212, %v33
  %v214 = vpop.permute.xlu0 %213
  %216 = vset.pattern.permute.xlu0 3
  %217 = vperm.xlu0 %216, %v34
  %v218 = vpop.permute.xlu0 %217
  %220 = vset.pattern.permute.xlu0 3
  %221 = vperm.xlu0 %220, %v35
  %v222 = vpop.permute.xlu0 %221
  %v224 = vlaneseq
  %v225 = vshrl.u32 %v224, 7
  %v226 = vsub.s32 3, %v225
  %v227 = vrot.slane %v27, %v226
  %v228 = vmul.f32 %v194, %v227
  %v229 = vmul.f32 %v198, %v227
  %v230 = vmul.f32 %v202, %v227
  %v231 = vmul.f32 %v206, %v227
  %v232 = vmul.f32 %v210, %v227
  %v233 = vmul.f32 %v214, %v227
  %v234 = vmul.f32 %v218, %v227
  %v235 = vmul.f32 %v222, %v227
  %v236 = vadd.f32 %v184, %v228
  %v237 = vadd.f32 %v185, %v229
  %v238 = vadd.f32 %v186, %v230
  %v239 = vadd.f32 %v187, %v231
  %v240 = vadd.f32 %v188, %v232
  %v241 = vadd.f32 %v189, %v233
  %v242 = vadd.f32 %v190, %v234
  %v243 = vadd.f32 %v191, %v235
  %v244 = vld [vmem:[%s2] sm:$0xff]
  %v245 = vld [vmem:[%s2 + $0x8] sm:$0xff]
  %v246 = vld [vmem:[%s2 + $0x10] sm:$0xff]
  %v247 = vld [vmem:[%s2 + $0x18] sm:$0xff]
  %v248 = vld [vmem:[%s2 + $0x20] sm:$0xff]
  %v249 = vld [vmem:[%s2 + $0x28] sm:$0xff]
  %v250 = vld [vmem:[%s2 + $0x30] sm:$0xff]
  %v251 = vld [vmem:[%s2 + $0x38] sm:$0xff]
  %253 = vset.pattern.permute.xlu0 0
  %254 = vperm.xlu0 %253, %v244
  %v255 = vpop.permute.xlu0 %254
  %258 = vset.pattern.permute.xlu0 0
  %259 = vperm.xlu0 %258, %v245
  %v260 = vpop.permute.xlu0 %259
  %263 = vset.pattern.permute.xlu0 0
  %264 = vperm.xlu0 %263, %v246
  %v265 = vpop.permute.xlu0 %264
  %268 = vset.pattern.permute.xlu0 0
  %269 = vperm.xlu0 %268, %v247
  %v270 = vpop.permute.xlu0 %269
  %273 = vset.pattern.permute.xlu0 0
  %274 = vperm.xlu0 %273, %v248
  %v275 = vpop.permute.xlu0 %274
  %278 = vset.pattern.permute.xlu0 0
  %279 = vperm.xlu0 %278, %v249
  %v280 = vpop.permute.xlu0 %279
  %283 = vset.pattern.permute.xlu0 0
  %284 = vperm.xlu0 %283, %v250
  %v285 = vpop.permute.xlu0 %284
  %288 = vset.pattern.permute.xlu0 0
  %289 = vperm.xlu0 %288, %v251
  %v290 = vpop.permute.xlu0 %289
  %v292 = vadd.f32 %v236, %v255
  %v293 = vadd.f32 %v237, %v260
  %v294 = vadd.f32 %v238, %v265
  %v295 = vadd.f32 %v239, %v270
  %v296 = vadd.f32 %v240, %v275
  %v297 = vadd.f32 %v241, %v280
  %v298 = vadd.f32 %v242, %v285
  %v299 = vadd.f32 %v243, %v290
  %v300 = vmax.f32 %v292, 0.0
  %v301 = vmax.f32 %v293, 0.0
  %v302 = vmax.f32 %v294, 0.0
  %v303 = vmax.f32 %v295, 0.0
  %v304 = vmax.f32 %v296, 0.0
  %v305 = vmax.f32 %v297, 0.0
  %v306 = vmax.f32 %v298, 0.0
  %v307 = vmax.f32 %v299, 0.0
  %v308 = vld [vmem:[%s3] sm:$0xf]
  %v309 = vld [vmem:[%s3 + $0x4] sm:$0xf]
  %v310 = vld [vmem:[%s3 + $0x8] sm:$0xf]
  %v311 = vld [vmem:[%s3 + $0xc] sm:$0xf]
  %v312 = vld [vmem:[%s3 + $0x10] sm:$0xf]
  %v313 = vld [vmem:[%s3 + $0x14] sm:$0xf]
  %v314 = vld [vmem:[%s3 + $0x18] sm:$0xf]
  %v315 = vld [vmem:[%s3 + $0x1c] sm:$0xf]
  %v316 = vpack.c.bf16 %v301, %v300
  %v317 = vpack.c.bf16 %v303, %v302
  %v318 = vpack.c.bf16 %v305, %v304
  %v319 = vpack.c.bf16 %v307, %v306
  %v320 = vld [vmem:[%s4] sm:$0xff]
  %v321 = vld [vmem:[%s4 + $0x8] sm:$0xff]
  %v322 = vld [vmem:[%s4 + $0x10] sm:$0xff]
  %v323 = vld [vmem:[%s4 + $0x18] sm:$0xff]
  %v324 = vld [vmem:[%s4 + $0x20] sm:$0xff]
  %v325 = vld [vmem:[%s4 + $0x28] sm:$0xff]
  %v326 = vld [vmem:[%s4 + $0x30] sm:$0xff]
  %v327 = vld [vmem:[%s4 + $0x38] sm:$0xff]
  %329 = vset.pattern.permute.xlu0 0
  %330 = vperm.xlu0 %329, %v320
  %v331 = vpop.permute.xlu0 %330
  %334 = vset.pattern.permute.xlu0 0
  %335 = vperm.xlu0 %334, %v321
  %v336 = vpop.permute.xlu0 %335
  %339 = vset.pattern.permute.xlu0 0
  %340 = vperm.xlu0 %339, %v322
  %v341 = vpop.permute.xlu0 %340
  %344 = vset.pattern.permute.xlu0 0
  %345 = vperm.xlu0 %344, %v323
  %v346 = vpop.permute.xlu0 %345
  %349 = vset.pattern.permute.xlu0 0
  %350 = vperm.xlu0 %349, %v324
  %v351 = vpop.permute.xlu0 %350
  %354 = vset.pattern.permute.xlu0 0
  %355 = vperm.xlu0 %354, %v325
  %v356 = vpop.permute.xlu0 %355
  %359 = vset.pattern.permute.xlu0 0
  %360 = vperm.xlu0 %359, %v326
  %v361 = vpop.permute.xlu0 %360
  %364 = vset.pattern.permute.xlu0 0
  %365 = vperm.xlu0 %364, %v327
  %v366 = vpop.permute.xlu0 %365
  %v376 = vunpack.c.l.b16 %v308
  %v377 = vunpack.c.l.b16 %v309
  %v378 = vunpack.c.l.b16 %v310
  %v379 = vunpack.c.l.b16 %v311
  %v380 = vunpack.c.l.b16 %v312
  %v381 = vunpack.c.l.b16 %v313
  %v382 = vunpack.c.l.b16 %v314
  %v383 = vunpack.c.l.b16 %v315
  %v384 = vpack.c.b16 %v377, %v376
  %v385 = vpack.c.b16 %v379, %v378
  %v386 = vpack.c.b16 %v381, %v380
  %v387 = vpack.c.b16 %v383, %v382
  %vm388 = vcmask 523264
  %v390 = vsel %vm388, %v384, 0
  %v393 = vsel %vm388, %v385, 0
  %v396 = vsel %vm388, %v386, 0
  %v399 = vsel %vm388, %v387, 0
  %401 = vmatprep.subr.bf16.mxu0 0
  %402 = vmatpush1.bf16.msra.mxu0 %v316
  %403 = vmatprep.subr.bf16.mxu0 0
  %404 = vmatpush1.bf16.msra.mxu0 %v317
  %405 = vmatprep.subr.bf16.mxu0 0
  %406 = vmatpush1.bf16.msra.mxu0 %v318
  %407 = vmatprep.subr.bf16.mxu0 0
  %408 = vmatpush1.bf16.msra.mxu0 %v319
  %409 = vmatprep.subr.bf16.mxu0 0
  %410 = vmatpush1.bf16.msra.mxu0 0
  %411 = vmatprep.subr.bf16.mxu0 0
  %412 = vmatpush1.bf16.msra.mxu0 0
  %413 = vmatprep.subr.bf16.mxu0 0
  %414 = vmatpush1.bf16.msra.mxu0 0
  %415 = vmatprep.subr.bf16.mxu0 0
  %416 = vmatpush1.bf16.msra.mxu0 0
  %417 = vmatprep.subr.bf16.mxu0 0
  %418 = vmatpush1.bf16.msra.mxu0 0
  %419 = vmatprep.subr.bf16.mxu0 0
  %420 = vmatpush1.bf16.msra.mxu0 0
  %421 = vmatprep.subr.bf16.mxu0 0
  %422 = vmatpush1.bf16.msra.mxu0 0
  %423 = vmatprep.subr.bf16.mxu0 0
  %424 = vmatpush1.bf16.msra.mxu0 0
  %425 = vmatprep.subr.bf16.mxu0 0
  %426 = vmatpush1.bf16.msra.mxu0 0
  %427 = vmatprep.subr.bf16.mxu0 0
  %428 = vmatpush1.bf16.msra.mxu0 0
  %429 = vmatprep.subr.bf16.mxu0 0
  %430 = vmatpush1.bf16.msra.mxu0 0
  %431 = vmatprep.subr.bf16.mxu0 0
  %432 = vmatpush1.bf16.msra.mxu0 0
  %433 = vmatprep.mubr.bf16.mxu0 0
  %434 = vmatmul.mubr.bf16.gmra.mrb[0].mxu0 %v390
  %v435 = vpop.f32.mrb[0].mxu0
  %v436 = vadd.f32 %v331, %v435
  %v437 = vpop.f32.mrb[0].mxu0
  %v438 = vpop.f32.mrb[0].mxu0
  %v439 = vadd.f32 %v336, %v438
  %v440 = vpop.f32.mrb[0].mxu0
  %441 = vmatprep.mubr.bf16.mxu0 0
  %442 = vmatmul.mubr.bf16.gmra.mrb[0].mxu0 %v393
  %v443 = vpop.f32.mrb[0].mxu0
  %v444 = vadd.f32 %v341, %v443
  %v445 = vpop.f32.mrb[0].mxu0
  %v446 = vpop.f32.mrb[0].mxu0
  %v447 = vadd.f32 %v346, %v446
  %v448 = vpop.f32.mrb[0].mxu0
  %449 = vmatprep.mubr.bf16.mxu0 0
  %450 = vmatmul.mubr.bf16.gmra.mrb[0].mxu0 %v396
  %v451 = vpop.f32.mrb[0].mxu0
  %v452 = vadd.f32 %v351, %v451
  %v453 = vpop.f32.mrb[0].mxu0
  %v454 = vpop.f32.mrb[0].mxu0
  %v455 = vadd.f32 %v356, %v454
  %v456 = vpop.f32.mrb[0].mxu0
  %457 = vmatprep.mubr.bf16.mxu0 0
  %458 = vmatmul.mubr.bf16.gmra.mrb[0].mxu0 %v399
  %v459 = vpop.f32.mrb[0].mxu0
  %v460 = vadd.f32 %v361, %v459
  %v461 = vpop.f32.mrb[0].mxu0
  %v462 = vpop.f32.mrb[0].mxu0
  %v463 = vadd.f32 %v366, %v462
  %v464 = vpop.f32.mrb[0].mxu0
  %465 = vdwg.mxu0
  %v466 = vmax.f32 %v436, 0.0
  %v467 = vmax.f32 %v439, 0.0
  %v468 = vmax.f32 %v444, 0.0
  %v469 = vmax.f32 %v447, 0.0
  %v470 = vmax.f32 %v452, 0.0
  %v471 = vmax.f32 %v455, 0.0
  %v472 = vmax.f32 %v460, 0.0
  %v473 = vmax.f32 %v463, 0.0
  %v474 = vld [vmem:[%s5] sm:$0x3]
  %v475 = vpack.c.bf16 %v467, %v466
  %v476 = vpack.c.bf16 %v469, %v468
  %v477 = vpack.c.bf16 %v471, %v470
  %v478 = vpack.c.bf16 %v473, %v472
  %v479 = vld [vmem:[%s6] sm:$0x7]
  %481 = vset.pattern.permute.xlu0 0
  %482 = vperm.xlu0 %481, %v479
  %v483 = vpop.permute.xlu0 %482
  %v486 = vsel %vm388, %v474, 0
  %488 = vmatprep.subr.bf16.mxu0 0
  %489 = vmatpush1.bf16.msra.mxu0 %v475
  %490 = vmatprep.subr.bf16.mxu0 0
  %491 = vmatpush1.bf16.msra.mxu0 %v476
  %492 = vmatprep.subr.bf16.mxu0 0
  %493 = vmatpush1.bf16.msra.mxu0 %v477
  %494 = vmatprep.subr.bf16.mxu0 0
  %495 = vmatpush1.bf16.msra.mxu0 %v478
  %496 = vmatprep.subr.bf16.mxu0 0
  %497 = vmatpush1.bf16.msra.mxu0 0
  %498 = vmatprep.subr.bf16.mxu0 0
  %499 = vmatpush1.bf16.msra.mxu0 0
  %500 = vmatprep.subr.bf16.mxu0 0
  %501 = vmatpush1.bf16.msra.mxu0 0
  %502 = vmatprep.subr.bf16.mxu0 0
  %503 = vmatpush1.bf16.msra.mxu0 0
  %504 = vmatprep.subr.bf16.mxu0 0
  %505 = vmatpush1.bf16.msra.mxu0 0
  %506 = vmatprep.subr.bf16.mxu0 0
  %507 = vmatpush1.bf16.msra.mxu0 0
  %508 = vmatprep.subr.bf16.mxu0 0
  %509 = vmatpush1.bf16.msra.mxu0 0
  %510 = vmatprep.subr.bf16.mxu0 0
  %511 = vmatpush1.bf16.msra.mxu0 0
  %512 = vmatprep.subr.bf16.mxu0 0
  %513 = vmatpush1.bf16.msra.mxu0 0
  %514 = vmatprep.subr.bf16.mxu0 0
  %515 = vmatpush1.bf16.msra.mxu0 0
  %516 = vmatprep.subr.bf16.mxu0 0
  %517 = vmatpush1.bf16.msra.mxu0 0
  %518 = vmatprep.subr.bf16.mxu0 0
  %519 = vmatpush1.bf16.msra.mxu0 0
  %520 = vmatprep.mubr.bf16.mxu0 0
  %521 = vmatmul.mubr.bf16.gmra.mrb[0].mxu0 %v486
  %v522 = vpop.f32.mrb[0].mxu0
  %v523 = vadd.f32 %v483, %v522
  %v524 = vpop.f32.mrb[0].mxu0
  %v525 = vpop.f32.mrb[0].mxu0
  %v526 = vpop.f32.mrb[0].mxu0
  %527 = vdwg.mxu0
  %528 = vst [vmem:[%s7] sm:$0x7] %v523
  // Predicated region
  $region30: #{s_net_forward.1} parent=0 // pred_check
    _
  $region31: #{s_net_forward.1} parent=0 // pred_check_branch
    %530 = sbr.rel (0) target = $region33
  $region32: #{s_net_forward.1} parent=0 // pred_region
    _
  $region33: #{s_net_forward.1} parent=0 // pred_fallthru
    _
  // Predicated region
  $region34: #{s_net_forward.1} parent=0 // pred_check
    _
  $region35: #{s_net_forward.1} parent=0 // pred_check_branch
    %532 = sbr.rel (0) target = $region37
  $region36: #{s_net_forward.1} parent=0 // pred_region
    _
  $region37: #{s_net_forward.1} parent=0 // pred_fallthru
    _

</llo_original>
